<compile_context>
chip_gen: v6e
topology: v6e:2x2x1
jax: 0.10.0
libtpu: 0.0.40
codegen_flags: <defaults>
</compile_context>

<pallas_src>
import jax
import jax.numpy as jnp
from jax.experimental import pallas as pl
from jax.experimental.pallas import tpu as pltpu

LANE = 128


def _round_up(n, m):
    return ((n + m - 1) // m) * m


def _policy_kernel(x_ref, w1_ref, b1_ref, w2_ref, b2_ref, w3_ref, b3_ref, out_ref):
    # x tile: (TB, F_pad) bf16; w1 bf16; w2/w3/biases f32.
    x = x_ref[...]

    # Linear 1 (bf16 MXU, f32 accumulate) + LeakyReLU(0.1)
    h = jnp.dot(x, w1_ref[...], preferred_element_type=jnp.float32) + b1_ref[...]
    h = jnp.maximum(h, 0.1 * h)

    # Linear 2 (f32, tiny) + LeakyReLU(0.1)
    h = jnp.dot(h, w2_ref[...], preferred_element_type=jnp.float32) + b2_ref[...]
    h = jnp.maximum(h, 0.1 * h)

    # Linear 3 (logits); padded action columns carry a -1e30 bias -> softmax ~ 0
    logits = jnp.dot(h, w3_ref[...], preferred_element_type=jnp.float32) + b3_ref[...]

    # numerically-stable softmax over the action axis (exact normalization)
    m = jnp.max(logits, axis=-1, keepdims=True)
    e = jnp.exp(logits - m)
    denom = jnp.sum(e, axis=-1, keepdims=True)
    out_ref[...] = (e / denom).astype(out_ref.dtype)


def prepare_params(params):
    """One-time padding / casting of the weights (hoisted out of the forward)."""
    w1, b1, w2, b2, w3, b3 = params            # stored (in, out) / (1, out), f32
    F_in, H1 = w1.shape
    H2 = w2.shape[1]
    A = w3.shape[1]
    F_pad = _round_up(F_in, LANE)
    H1_pad = _round_up(H1, LANE)
    H2_pad = _round_up(H2, LANE)
    A_pad = _round_up(A, LANE)

    w1p = jnp.pad(w1.astype(jnp.bfloat16), ((0, F_pad - F_in), (0, H1_pad - H1)))
    b1p = jnp.pad(b1.reshape(1, H1).astype(jnp.float32), ((0, 0), (0, H1_pad - H1)))
    w2p = jnp.pad(w2.astype(jnp.float32), ((0, H1_pad - H1), (0, H2_pad - H2)))
    b2p = jnp.pad(b2.reshape(1, H2).astype(jnp.float32), ((0, 0), (0, H2_pad - H2)))
    w3p = jnp.pad(w3.astype(jnp.float32), ((0, H2_pad - H2), (0, A_pad - A)))
    # very negative bias on padded action columns -> exp() underflows to 0
    b3p = jnp.pad(b3.reshape(1, A).astype(jnp.float32), ((0, 0), (0, A_pad - A)),
                  constant_values=-1e30)

    return {
        "w1p": w1p, "b1p": b1p, "w2p": w2p, "b2p": b2p, "w3p": w3p, "b3p": b3p,
        "F_in": F_in, "F_pad": F_pad, "H1_pad": H1_pad, "H2_pad": H2_pad,
        "A": A, "A_pad": A_pad,
    }


def _pick_tb(B):
    """Batch tile: multiple of 16, up to 1024, >=2 grid steps when B allows."""
    if B <= 16:
        return _round_up(max(B, 1), 16)
    half = _round_up((B + 1) // 2, 16)   # at least 2 steps -> both v7x TCs used
    return min(1024, half)


def policy_net_forward(x, prepped):
    """x: (B, ...) -> flattened to (B, F) (nn.Flatten). Returns (B, A) f32 probs."""
    B = x.shape[0]
    x2 = x.reshape(B, -1)
    F_in, F_pad = prepped["F_in"], prepped["F_pad"]
    H1_pad, H2_pad = prepped["H1_pad"], prepped["H2_pad"]
    A, A_pad = prepped["A"], prepped["A_pad"]
    assert x2.shape[1] == F_in, (x2.shape, F_in)

    TB = _pick_tb(B)
    B_pad = _round_up(B, TB)

    # single fused pad+cast of the activations (skipped when already aligned)
    xb = x2.astype(jnp.bfloat16)
    if B_pad != B or F_pad != F_in:
        xb = jnp.pad(xb, ((0, B_pad - B), (0, F_pad - F_in)))

    grid = (B_pad // TB,)

    flops = 2 * B_pad * (F_pad * H1_pad + H1_pad * H2_pad + H2_pad * A_pad)
    transcendentals = B_pad * A_pad
    bytes_accessed = (
        B_pad * F_pad * 2                                # x (bf16 in)
        + F_pad * H1_pad * 2                             # w1 (bf16)
        + (H1_pad * H2_pad + H2_pad * A_pad) * 4         # w2, w3 (f32)
        + (H1_pad + H2_pad + A_pad) * 4                  # biases
        + B_pad * A_pad * 2                              # probs (bf16 out)
    )

    out = pl.pallas_call(
        _policy_kernel,
        out_shape=jax.ShapeDtypeStruct((B_pad, A_pad), jnp.bfloat16),
        grid=grid,
        in_specs=[
            pl.BlockSpec((TB, F_pad), lambda i: (i, 0)),        # x tile (pipelined)
            pl.BlockSpec((F_pad, H1_pad), lambda i: (0, 0)),    # w1 (resident)
            pl.BlockSpec((1, H1_pad), lambda i: (0, 0)),        # b1
            pl.BlockSpec((H1_pad, H2_pad), lambda i: (0, 0)),   # w2
            pl.BlockSpec((1, H2_pad), lambda i: (0, 0)),        # b2
            pl.BlockSpec((H2_pad, A_pad), lambda i: (0, 0)),    # w3
            pl.BlockSpec((1, A_pad), lambda i: (0, 0)),         # b3
        ],
        out_specs=pl.BlockSpec((TB, A_pad), lambda i: (i, 0)),
        compiler_params=pltpu.CompilerParams(
            dimension_semantics=("parallel",)),
        cost_estimate=pl.CostEstimate(
            flops=flops, transcendentals=transcendentals,
            bytes_accessed=bytes_accessed),
    )(xb, prepped["w1p"], prepped["b1p"], prepped["w2p"], prepped["b2p"],
      prepped["w3p"], prepped["b3p"])

    # tiny (B, A) slice; cast back to f32 for downstream consumers
    return out[:B, :A].astype(jnp.float32)


def init_params(key, input_size, action_size):
    """Deterministic synthetic init (PyTorch-Linear-like uniform ranges)."""
    def linear(k, fan_in, fan_out):
        k_w, k_b = jax.random.split(k)
        bound = 1.0 / jnp.sqrt(float(fan_in))
        # stored as (in, out) so the kernel does x @ W
        w = jax.random.uniform(k_w, (fan_in, fan_out), jnp.float32, -bound, bound)
        b = jax.random.uniform(k_b, (1, fan_out), jnp.float32, -bound, bound)
        return w, b

    k1, k2, k3 = jax.random.split(key, 3)
    w1, b1 = linear(k1, input_size, 128)
    w2, b2 = linear(k2, 128, 32)
    w3, b3 = linear(k3, 32, action_size)
    return (w1, b1, w2, b2, w3, b3)


def _reference_forward(x, params):
    """Pure-JAX f32 reference matching the PyTorch module."""
    w1, b1, w2, b2, w3, b3 = params
    B = x.shape[0]
    h = x.reshape(B, -1).astype(jnp.float32)
    h = h @ w1 + b1
    h = jnp.where(h > 0, h, 0.1 * h)
    h = h @ w2 + b2
    h = jnp.where(h > 0, h, 0.1 * h)
    logits = h @ w3 + b3
    return jax.nn.softmax(logits, axis=1)


if __name__ == "__main__":
    key = jax.random.PRNGKey(0)
    k_in, k_in2, k_p = jax.random.split(key, 3)

    batch = 2
    spatial = (4, 4, 4)           # flattened -> input_size = 64 (nn.Flatten)
    input_size = 4 * 4 * 4
    action_size = 4

    params = init_params(k_p, input_size, action_size)
    prepped = prepare_params(params)   # one-time padding / casting

    # --- small-batch check (single grid step) ---
    x = jax.random.normal(k_in, (batch,) + spatial, jnp.float32)
    probs = jax.block_until_ready(policy_net_forward(x, prepped))

    assert probs.shape == (batch, action_size)
    row_sums = jnp.sum(probs, axis=1)
    assert bool(jnp.all(jnp.abs(row_sums - 1.0) < 3e-2)), row_sums
    ref = _reference_forward(x, params)
    assert bool(jnp.all(jnp.abs(probs - ref) < 5e-2)), jnp.max(jnp.abs(probs - ref))

    # --- larger-batch check (exercises padding + a >=2-step grid) ---
    x_big = jax.random.normal(k_in2, (40,) + spatial, jnp.float32)
    probs_big = jax.block_until_ready(policy_net_forward(x_big, prepped))
    assert probs_big.shape == (40, action_size)
    ref_big = _reference_forward(x_big, params)
    assert bool(jnp.all(jnp.abs(probs_big - ref_big) < 5e-2)), \
        jnp.max(jnp.abs(probs_big - ref_big))

    print("KERNEL_OK")
</pallas_src>

<mosaic_0001>
module attributes {stable_mosaic.version = 11 : i64} {
  func.func @_policy_kernel(%arg0: i32, %arg1: memref<16x128xbf16, #tpu.memory_space<vmem>>, %arg2: memref<128x128xbf16, #tpu.memory_space<vmem>>, %arg3: memref<1x128xf32, #tpu.memory_space<vmem>>, %arg4: memref<128x128xf32, #tpu.memory_space<vmem>>, %arg5: memref<1x128xf32, #tpu.memory_space<vmem>>, %arg6: memref<128x128xf32, #tpu.memory_space<vmem>>, %arg7: memref<1x128xf32, #tpu.memory_space<vmem>>, %arg8: memref<16x128xbf16, #tpu.memory_space<vmem>>) attributes {dimension_semantics = [#tpu.dimension_semantics<parallel>], iteration_bounds = array<i64: 1>, scalar_prefetch = 0 : i64, scratch_operands = 0 : i64, tpu.core_type = #tpu.core_type<tc>, window_params = [{transform_indices = @transform_0, window_bounds = array<i64: 16, 128>}, {pipeline_mode = #tpu.pipeline_mode<synchronous>, transform_indices = @transform_1, window_bounds = array<i64: 128, 128>}, {pipeline_mode = #tpu.pipeline_mode<synchronous>, transform_indices = @transform_2, window_bounds = array<i64: 1, 128>}, {pipeline_mode = #tpu.pipeline_mode<synchronous>, transform_indices = @transform_3, window_bounds = array<i64: 128, 128>}, {pipeline_mode = #tpu.pipeline_mode<synchronous>, transform_indices = @transform_4, window_bounds = array<i64: 1, 128>}, {pipeline_mode = #tpu.pipeline_mode<synchronous>, transform_indices = @transform_5, window_bounds = array<i64: 128, 128>}, {pipeline_mode = #tpu.pipeline_mode<synchronous>, transform_indices = @transform_6, window_bounds = array<i64: 1, 128>}, {transform_indices = @transform_7, window_bounds = array<i64: 16, 128>}]} {
    %c0 = arith.constant 0 : index
    %c0_0 = arith.constant 0 : index
    %0 = vector.load %arg1[%c0, %c0_0] : memref<16x128xbf16, #tpu.memory_space<vmem>>, vector<16x128xbf16>
    %c0_1 = arith.constant 0 : index
    %c0_2 = arith.constant 0 : index
    %1 = vector.load %arg2[%c0_1, %c0_2] : memref<128x128xbf16, #tpu.memory_space<vmem>>, vector<128x128xbf16>
    %cst = arith.constant dense<0.000000e+00> : vector<16x128xf32>
    %2 = tpu.matmul %0, %1, %cst {dimension_numbers = #tpu.dot_dimension_numbers<[1], [0], [0], [1], [0, 0, 1, 1], [], []>} : vector<16x128xbf16>, vector<128x128xbf16>, vector<16x128xf32> -> vector<16x128xf32>
    %c0_3 = arith.constant 0 : index
    %c0_4 = arith.constant 0 : index
    %3 = vector.load %arg3[%c0_3, %c0_4] : memref<1x128xf32, #tpu.memory_space<vmem>>, vector<1x128xf32>
    %4 = vector.broadcast %3 : vector<1x128xf32> to vector<16x128xf32>
    %5 = arith.addf %2, %4 : vector<16x128xf32>
    %cst_5 = arith.constant 1.000000e-01 : f32
    %6 = vector.broadcast %cst_5 : f32 to vector<16x128xf32>
    %7 = arith.mulf %6, %5 : vector<16x128xf32>
    %8 = arith.maximumf %5, %7 : vector<16x128xf32>
    %c0_6 = arith.constant 0 : index
    %c0_7 = arith.constant 0 : index
    %9 = vector.load %arg4[%c0_6, %c0_7] : memref<128x128xf32, #tpu.memory_space<vmem>>, vector<128x128xf32>
    %cst_8 = arith.constant dense<0.000000e+00> : vector<16x128xf32>
    %10 = tpu.matmul %8, %9, %cst_8 {dimension_numbers = #tpu.dot_dimension_numbers<[1], [0], [0], [1], [0, 0, 1, 1], [], []>} : vector<16x128xf32>, vector<128x128xf32>, vector<16x128xf32> -> vector<16x128xf32>
    %c0_9 = arith.constant 0 : index
    %c0_10 = arith.constant 0 : index
    %11 = vector.load %arg5[%c0_9, %c0_10] : memref<1x128xf32, #tpu.memory_space<vmem>>, vector<1x128xf32>
    %12 = vector.broadcast %11 : vector<1x128xf32> to vector<16x128xf32>
    %13 = arith.addf %10, %12 : vector<16x128xf32>
    %cst_11 = arith.constant 1.000000e-01 : f32
    %14 = vector.broadcast %cst_11 : f32 to vector<16x128xf32>
    %15 = arith.mulf %14, %13 : vector<16x128xf32>
    %16 = arith.maximumf %13, %15 : vector<16x128xf32>
    %c0_12 = arith.constant 0 : index
    %c0_13 = arith.constant 0 : index
    %17 = vector.load %arg6[%c0_12, %c0_13] : memref<128x128xf32, #tpu.memory_space<vmem>>, vector<128x128xf32>
    %cst_14 = arith.constant dense<0.000000e+00> : vector<16x128xf32>
    %18 = tpu.matmul %16, %17, %cst_14 {dimension_numbers = #tpu.dot_dimension_numbers<[1], [0], [0], [1], [0, 0, 1, 1], [], []>} : vector<16x128xf32>, vector<128x128xf32>, vector<16x128xf32> -> vector<16x128xf32>
    %c0_15 = arith.constant 0 : index
    %c0_16 = arith.constant 0 : index
    %19 = vector.load %arg7[%c0_15, %c0_16] : memref<1x128xf32, #tpu.memory_space<vmem>>, vector<1x128xf32>
    %20 = vector.broadcast %19 : vector<1x128xf32> to vector<16x128xf32>
    %21 = arith.addf %18, %20 : vector<16x128xf32>
    %cst_17 = arith.constant dense<0xFF800000> : vector<16xf32>
    %22 = vector.multi_reduction <maximumf>, %21, %cst_17 [1] : vector<16x128xf32> to vector<16xf32>
    %23 = vector.shape_cast %22 : vector<16xf32> to vector<16x1xf32>
    %24 = vector.broadcast %23 : vector<16x1xf32> to vector<16x128xf32>
    %25 = arith.subf %21, %24 : vector<16x128xf32>
    %26 = math.exp %25 : vector<16x128xf32>
    %cst_18 = arith.constant dense<0.000000e+00> : vector<16xf32>
    %27 = vector.multi_reduction <add>, %26, %cst_18 [1] : vector<16x128xf32> to vector<16xf32>
    %28 = vector.shape_cast %27 : vector<16xf32> to vector<16x1xf32>
    %29 = vector.broadcast %28 : vector<16x1xf32> to vector<16x128xf32>
    %30 = arith.divf %26, %29 : vector<16x128xf32>
    %31 = arith.truncf %30 : vector<16x128xf32> to vector<16x128xbf16>
    %c0_19 = arith.constant 0 : index
    %c0_20 = arith.constant 0 : index
    %32 = vector.load %arg8[%c0_19, %c0_20] : memref<16x128xbf16, #tpu.memory_space<vmem>>, vector<16x128xbf16>
    tpu.vector_store %arg8[%c0_19, %c0_20], %31 {strides = array<i32>} : memref<16x128xbf16, #tpu.memory_space<vmem>>, vector<16x128xbf16>,
    return
  }
  func.func @transform_0(%arg0: i32) -> (i32, i32) {
    %c0_i32 = arith.constant 0 : i32
    %c0_i32_0 = arith.constant 0 : i32
    return %arg0, %c0_i32 : i32, i32
  }
  func.func @transform_1(%arg0: i32) -> (i32, i32) {
    %c0_i32 = arith.constant 0 : i32
    %c0_i32_0 = arith.constant 0 : i32
    %c0_i32_1 = arith.constant 0 : i32
    return %c0_i32, %c0_i32_0 : i32, i32
  }
  func.func @transform_2(%arg0: i32) -> (i32, i32) {
    %c0_i32 = arith.constant 0 : i32
    %c0_i32_0 = arith.constant 0 : i32
    %c0_i32_1 = arith.constant 0 : i32
    return %c0_i32, %c0_i32_0 : i32, i32
  }
  func.func @transform_3(%arg0: i32) -> (i32, i32) {
    %c0_i32 = arith.constant 0 : i32
    %c0_i32_0 = arith.constant 0 : i32
    %c0_i32_1 = arith.constant 0 : i32
    return %c0_i32, %c0_i32_0 : i32, i32
  }
  func.func @transform_4(%arg0: i32) -> (i32, i32) {
    %c0_i32 = arith.constant 0 : i32
    %c0_i32_0 = arith.constant 0 : i32
    %c0_i32_1 = arith.constant 0 : i32
    return %c0_i32, %c0_i32_0 : i32, i32
  }
  func.func @transform_5(%arg0: i32) -> (i32, i32) {
    %c0_i32 = arith.constant 0 : i32
    %c0_i32_0 = arith.constant 0 : i32
    %c0_i32_1 = arith.constant 0 : i32
    return %c0_i32, %c0_i32_0 : i32, i32
  }
  func.func @transform_6(%arg0: i32) -> (i32, i32) {
    %c0_i32 = arith.constant 0 : i32
    %c0_i32_0 = arith.constant 0 : i32
    %c0_i32_1 = arith.constant 0 : i32
    return %c0_i32, %c0_i32_0 : i32, i32
  }
  func.func @transform_7(%arg0: i32) -> (i32, i32) {
    %c0_i32 = arith.constant 0 : i32
    %c0_i32_0 = arith.constant 0 : i32
    return %arg0, %c0_i32 : i32, i32
  }
}

</mosaic_0001>

<llo_original>
// kernel: tpu_custom_call.1
$region0: #{tpu_custom_call.1}
  #allocation0 [shape = 'u32[]', space=smem, size = 0x4, offset = 0x4, fixed_abs, tag = 'smem constant byte address 0x4 - core index']
  #allocation1 [shape = 'u32[144,128]{1,0:T(1,128)}', space=vmem, size = 0x12000, scoped, tag = 'internal scratch']
  %s0 = inlined_call_operand.hbm [shape: bf16[16,128], index: 0, kind: input, shape index: {}]
  %s1 = inlined_call_operand.hbm [shape: bf16[128,128], index: 1, kind: input, shape index: {}]
  %s2 = inlined_call_operand.vmem [shape: f32[1,128], index: 2, kind: input, shape index: {}]
  %s3 = inlined_call_operand.hbm [shape: f32[128,128], index: 3, kind: input, shape index: {}]
  %s4 = inlined_call_operand.vmem [shape: f32[1,128], index: 4, kind: input, shape index: {}]
  %s5 = inlined_call_operand.hbm [shape: f32[128,128], index: 5, kind: input, shape index: {}]
  %s6 = inlined_call_operand.vmem [shape: f32[1,128], index: 6, kind: input, shape index: {}]
  %s7 = inlined_call_operand.hbm [shape: bf16[16,128], index: 7, kind: output, shape index: {}]
  %s8 = sld [smem:[#allocation0]]
  $region54: #{tpu_custom_call.1} parent=0
    _
  %s10 = ssub.s32 1, %s8
  %s11 = scalar_select 0, %s10, %s8
  $region1: #{tpu_custom_call.1} parent=0
    #allocation2 [shape = 'u8[4096]{0}', space=vmem, size = 0x1000, scoped, tag = 'input window, operand 0, single buffered']
    #allocation3 [shape = 's32[1]{0}', space=sflag, size = 0x4, scoped, tag = 'scoped memory for tpu_custom_call.1']
    #allocation4 [shape = 's32[1]{0}', space=sflag, size = 0x4, scoped, tag = 'scoped memory for tpu_custom_call.1']
    #allocation5 [shape = 'u8[32768]{0}', space=vmem, size = 0x8000, scoped, tag = 'input window, operand 1, single buffered']
    #allocation6 [shape = 's32[1]{0}', space=sflag, size = 0x4, scoped, tag = 'scoped memory for tpu_custom_call.1']
    #allocation7 [shape = 'u8[65536]{0}', space=vmem, size = 0x10000, scoped, tag = 'input window, operand 3, single buffered']
    #allocation8 [shape = 'u8[65536]{0}', space=vmem, size = 0x10000, scoped, tag = 'input window, operand 5, single buffered']
    #allocation9 [shape = 's32[1]{0}', space=sflag, size = 0x4, scoped, tag = 'scoped memory for tpu_custom_call.1']
    #allocation10 [shape = 'u8[4096]{0}', space=vmem, size = 0x1000, scoped, tag = 'output window, operand 0, single buffered']
    %12 = vsyncpa [#allocation3], 0
    %13 = vsyncpa [#allocation6], 0
    %14 = vsyncpa [#allocation9], 0
    %15 = vsyncpa [#allocation4], 0
    // Predicated region
    $region2: #{tpu_custom_call.1} parent=1 // pred_check
      _
    $region3: #{tpu_custom_call.1} parent=1 // pred_check_branch
      %17 = sbr.rel (0) target = $region5
    $region4: #{tpu_custom_call.1} parent=1 // pred_region
      %s19 = ssub.s32 128, 128
      %20 = vsyncadd [#allocation3], %s19
      %s21 = sshll.u32 [#allocation2], 4
      %s22 = int_to_ptr.vmem [resolvable:$true] %s21
      %27 = dma.hbm_to_vmem [thread:$0]  %s0, 128, %s22, [#allocation3], 64, 64, 4
    $region5: #{tpu_custom_call.1} parent=1 // pred_fallthru
      _
    // Predicated region
    $region6: #{tpu_custom_call.1} parent=1 // pred_check
      _
    $region7: #{tpu_custom_call.1} parent=1 // pred_check_branch
      %29 = sbr.rel (0) target = $region9
    $region8: #{tpu_custom_call.1} parent=1 // pred_region
      %s31 = ssub.s32 1024, 1024
      %32 = vsyncadd [#allocation6], %s31
      %s33 = sshll.u32 [#allocation5], 4
      %s34 = int_to_ptr.vmem [resolvable:$true] %s33
      %39 = dma.hbm_to_vmem [thread:$0]  %s1, 1024, %s34, [#allocation6], 64, 64, 4
    $region9: #{tpu_custom_call.1} parent=1 // pred_fallthru
      _
    // Predicated region
    $region10: #{tpu_custom_call.1} parent=1 // pred_check
      _
    $region11: #{tpu_custom_call.1} parent=1 // pred_check_branch
      %41 = sbr.rel (0) target = $region13
    $region12: #{tpu_custom_call.1} parent=1 // pred_region
      _
    $region13: #{tpu_custom_call.1} parent=1 // pred_fallthru
      _
    // Predicated region
    $region14: #{tpu_custom_call.1} parent=1 // pred_check
      _
    $region15: #{tpu_custom_call.1} parent=1 // pred_check_branch
      %43 = sbr.rel (0) target = $region17
    $region16: #{tpu_custom_call.1} parent=1 // pred_region
      %s45 = ssub.s32 2048, 2048
      %46 = vsyncadd [#allocation6], %s45
      %s47 = sshll.u32 [#allocation7], 4
      %s48 = int_to_ptr.vmem [resolvable:$true] %s47
      %53 = dma.hbm_to_vmem [thread:$0]  %s3, 2048, %s48, [#allocation6], 128, 128, 8
    $region17: #{tpu_custom_call.1} parent=1 // pred_fallthru
      _
    // Predicated region
    $region18: #{tpu_custom_call.1} parent=1 // pred_check
      _
    $region19: #{tpu_custom_call.1} parent=1 // pred_check_branch
      %55 = sbr.rel (0) target = $region21
    $region20: #{tpu_custom_call.1} parent=1 // pred_region
      _
    $region21: #{tpu_custom_call.1} parent=1 // pred_fallthru
      _
    // Predicated region
    $region22: #{tpu_custom_call.1} parent=1 // pred_check
      _
    $region23: #{tpu_custom_call.1} parent=1 // pred_check_branch
      %57 = sbr.rel (0) target = $region25
    $region24: #{tpu_custom_call.1} parent=1 // pred_region
      %s59 = ssub.s32 2048, 2048
      %60 = vsyncadd [#allocation9], %s59
      %s61 = sshll.u32 [#allocation8], 4
      %s62 = int_to_ptr.vmem [resolvable:$true] %s61
      %67 = dma.hbm_to_vmem [thread:$0]  %s5, 2048, %s62, [#allocation9], 128, 128, 8
    $region25: #{tpu_custom_call.1} parent=1 // pred_fallthru
      _
    // Predicated region
    $region26: #{tpu_custom_call.1} parent=1 // pred_check
      _
    $region27: #{tpu_custom_call.1} parent=1 // pred_check_branch
      %69 = sbr.rel (0) target = $region29
    $region28: #{tpu_custom_call.1} parent=1 // pred_region
      _
    $region29: #{tpu_custom_call.1} parent=1 // pred_fallthru
      _
    // Predicated region
    $region30: #{tpu_custom_call.1} parent=1 // pred_check
      _
    $region31: #{tpu_custom_call.1} parent=1 // pred_check_branch
      %71 = sbr.rel (0) target = $region33
    $region32: #{tpu_custom_call.1} parent=1 // pred_region
      %72 = dma.done [#allocation3], 128
    $region33: #{tpu_custom_call.1} parent=1 // pred_fallthru
      _
    // Predicated region
    $region34: #{tpu_custom_call.1} parent=1 // pred_check
      _
    $region35: #{tpu_custom_call.1} parent=1 // pred_check_branch
      %74 = sbr.rel (0) target = $region37
    $region36: #{tpu_custom_call.1} parent=1 // pred_region
      %75 = dma.done [#allocation6], 1024
    $region37: #{tpu_custom_call.1} parent=1 // pred_fallthru
      _
    // Predicated region
    $region38: #{tpu_custom_call.1} parent=1 // pred_check
      _
    $region39: #{tpu_custom_call.1} parent=1 // pred_check_branch
      %77 = sbr.rel (0) target = $region41
    $region40: #{tpu_custom_call.1} parent=1 // pred_region
      %78 = dma.done [#allocation6], 2048
    $region41: #{tpu_custom_call.1} parent=1 // pred_fallthru
      _
    // Predicated region
    $region42: #{tpu_custom_call.1} parent=1 // pred_check
      _
    $region43: #{tpu_custom_call.1} parent=1 // pred_check_branch
      %80 = sbr.rel (0) target = $region45
    $region44: #{tpu_custom_call.1} parent=1 // pred_region
      %81 = dma.done [#allocation9], 2048
    $region45: #{tpu_custom_call.1} parent=1 // pred_fallthru
      _
    %v83 = vld [vmem:[#allocation2] sm:$0xf]
    %v84 = vld [vmem:[#allocation2 + $0x4] sm:$0xf]
    %v85 = vld [vmem:[#allocation5] sm:$0xf]
    %v86 = vld [vmem:[#allocation5 + $0x4] sm:$0xf]
    %v87 = vld [vmem:[#allocation5 + $0x8] sm:$0xf]
    %v88 = vld [vmem:[#allocation5 + $0xc] sm:$0xf]
    %v89 = vld [vmem:[#allocation5 + $0x10] sm:$0xf]
    %v90 = vld [vmem:[#allocation5 + $0x14] sm:$0xf]
    %v91 = vld [vmem:[#allocation5 + $0x18] sm:$0xf]
    %v92 = vld [vmem:[#allocation5 + $0x1c] sm:$0xf]
    %v93 = vld [vmem:[#allocation5 + $0x20] sm:$0xf]
    %v94 = vld [vmem:[#allocation5 + $0x24] sm:$0xf]
    %v95 = vld [vmem:[#allocation5 + $0x28] sm:$0xf]
    %v96 = vld [vmem:[#allocation5 + $0x2c] sm:$0xf]
    %v97 = vld [vmem:[#allocation5 + $0x30] sm:$0xf]
    %v98 = vld [vmem:[#allocation5 + $0x34] sm:$0xf]
    %v99 = vld [vmem:[#allocation5 + $0x38] sm:$0xf]
    %v100 = vld [vmem:[#allocation5 + $0x3c] sm:$0xf]
    %v101 = vld [vmem:[%s2] sm:$0x1]
    %v103 = vlaneseq
    %v104 = vshrl.u32 %v103, 7
    %v105 = vsub.s32 0, %v104
    %v106 = vrot.slane %v101, %v105
    %v110 = vunpack.c.l.b16 %v83
    %v111 = vunpack.c.l.b16 %v84
    %v112 = vpack.c.b16 %v111, %v110
    %v130 = vunpack.c.l.b16 %v85
    %v131 = vunpack.c.l.b16 %v86
    %v132 = vunpack.c.l.b16 %v87
    %v133 = vunpack.c.l.b16 %v88
    %v134 = vunpack.c.l.b16 %v89
    %v135 = vunpack.c.l.b16 %v90
    %v136 = vunpack.c.l.b16 %v91
    %v137 = vunpack.c.l.b16 %v92
    %v138 = vunpack.c.l.b16 %v93
    %v139 = vunpack.c.l.b16 %v94
    %v140 = vunpack.c.l.b16 %v95
    %v141 = vunpack.c.l.b16 %v96
    %v142 = vunpack.c.l.b16 %v97
    %v143 = vunpack.c.l.b16 %v98
    %v144 = vunpack.c.l.b16 %v99
    %v145 = vunpack.c.l.b16 %v100
    %v146 = vpack.c.b16 %v131, %v130
    %v147 = vpack.c.b16 %v133, %v132
    %v148 = vpack.c.b16 %v135, %v134
    %v149 = vpack.c.b16 %v137, %v136
    %v150 = vpack.c.b16 %v139, %v138
    %v151 = vpack.c.b16 %v141, %v140
    %v152 = vpack.c.b16 %v143, %v142
    %v153 = vpack.c.b16 %v145, %v144
    %162 = vmatprep.subr.bf16.mxu0 0
    %163 = vmatpush1.bf16.msra.mxu0 %v153
    %164 = vmatprep.subr.bf16.mxu0 0
    %165 = vmatpush1.bf16.msra.mxu0 %v152
    %166 = vmatprep.subr.bf16.mxu0 0
    %167 = vmatpush1.bf16.msra.mxu0 %v151
    %168 = vmatprep.subr.bf16.mxu0 0
    %169 = vmatpush1.bf16.msra.mxu0 %v150
    %170 = vmatprep.subr.bf16.mxu0 0
    %171 = vmatpush1.bf16.msra.mxu0 %v149
    %172 = vmatprep.subr.bf16.mxu0 0
    %173 = vmatpush1.bf16.msra.mxu0 %v148
    %174 = vmatprep.subr.bf16.mxu0 0
    %175 = vmatpush1.bf16.msra.mxu0 %v147
    %176 = vmatprep.subr.bf16.mxu0 0
    %177 = vmatpush1.bf16.msra.mxu0 %v146
    %178 = vmatprep.subr.bf16.mxu0 0
    %179 = vmatpush2.bf16.msra.mxu0 0
    %180 = vmatprep.subr.bf16.mxu0 0
    %181 = vmatpush2.bf16.msra.mxu0 0
    %182 = vmatprep.subr.bf16.mxu0 0
    %183 = vmatpush2.bf16.msra.mxu0 0
    %184 = vmatprep.subr.bf16.mxu0 0
    %185 = vmatpush2.bf16.msra.mxu0 0
    %186 = vmatprep.subr.bf16.mxu0 0
    %187 = vmatpush2.bf16.msra.mxu0 0
    %188 = vmatprep.subr.bf16.mxu0 0
    %189 = vmatpush2.bf16.msra.mxu0 0
    %190 = vmatprep.subr.bf16.mxu0 0
    %191 = vmatpush2.bf16.msra.mxu0 0
    %192 = vmatprep.subr.bf16.mxu0 0
    %193 = vmatpush2.bf16.msra.mxu0 0
    %194 = vmatprep.mubr.bf16.mxu0 0
    %195 = vmatmul.mubr.bf16.gmra.mxu0 %v112
    %v196 = vpop.f32.mrf.mxu0
    %v197 = vadd.f32 %v106, %v196
    %v198 = vpop.f32.mrf.mxu0
    %v199 = vpop.f32.mrf.mxu0
    %v200 = vadd.f32 %v106, %v199
    %v201 = vpop.f32.mrf.mxu0
    %202 = vdwg.mxu0
    %v203 = vmul.f32 %v197, 0.1
    %v204 = vmul.f32 %v200, 0.1
    %v205 = vmax.f32 %v197, %v203
    %v206 = vmax.f32 %v200, %v204
    %v207 = vld [vmem:[#allocation7] sm:$0xff]
    %v208 = vld [vmem:[#allocation7 + $0x8] sm:$0xff]
    %v209 = vld [vmem:[#allocation7 + $0x10] sm:$0xff]
    %v210 = vld [vmem:[#allocation7 + $0x18] sm:$0xff]
    %v211 = vld [vmem:[#allocation7 + $0x20] sm:$0xff]
    %v212 = vld [vmem:[#allocation7 + $0x28] sm:$0xff]
    %v213 = vld [vmem:[#allocation7 + $0x30] sm:$0xff]
    %v214 = vld [vmem:[#allocation7 + $0x38] sm:$0xff]
    %v215 = vld [vmem:[#allocation7 + $0x40] sm:$0xff]
    %v216 = vld [vmem:[#allocation7 + $0x48] sm:$0xff]
    %v217 = vld [vmem:[#allocation7 + $0x50] sm:$0xff]
    %v218 = vld [vmem:[#allocation7 + $0x58] sm:$0xff]
    %v219 = vld [vmem:[#allocation7 + $0x60] sm:$0xff]
    %v220 = vld [vmem:[#allocation7 + $0x68] sm:$0xff]
    %v221 = vld [vmem:[#allocation7 + $0x70] sm:$0xff]
    %v222 = vld [vmem:[#allocation7 + $0x78] sm:$0xff]
    %v223 = vld [vmem:[%s4] sm:$0x1]
    %v225 = vlaneseq
    %v226 = vshrl.u32 %v225, 7
    %v227 = vsub.s32 0, %v226
    %v228 = vrot.slane %v223, %v227
    %230 = vmatprep.subr.mxu0 0.0
    %231 = vmatpush1.msra.mxu0 %v222
    %232 = vmatprep.subr.mxu0 0.0
    %233 = vmatpush1.msra.mxu0 %v221
    %234 = vmatprep.subr.mxu0 0.0
    %235 = vmatpush1.msra.mxu0 %v220
    %236 = vmatprep.subr.mxu0 0.0
    %237 = vmatpush1.msra.mxu0 %v219
    %238 = vmatprep.subr.mxu0 0.0
    %239 = vmatpush1.msra.mxu0 %v218
    %240 = vmatprep.subr.mxu0 0.0
    %241 = vmatpush1.msra.mxu0 %v217
    %242 = vmatprep.subr.mxu0 0.0
    %243 = vmatpush1.msra.mxu0 %v216
    %244 = vmatprep.subr.mxu0 0.0
    %245 = vmatpush1.msra.mxu0 %v215
    %246 = vmatprep.subr.mxu0 0.0
    %247 = vmatpush1.msra.mxu0 %v214
    %248 = vmatprep.subr.mxu0 0.0
    %249 = vmatpush1.msra.mxu0 %v213
    %250 = vmatprep.subr.mxu0 0.0
    %251 = vmatpush1.msra.mxu0 %v212
    %252 = vmatprep.subr.mxu0 0.0
    %253 = vmatpush1.msra.mxu0 %v211
    %254 = vmatprep.subr.mxu0 0.0
    %255 = vmatpush1.msra.mxu0 %v210
    %256 = vmatprep.subr.mxu0 0.0
    %257 = vmatpush1.msra.mxu0 %v209
    %258 = vmatprep.subr.mxu0 0.0
    %259 = vmatpush1.msra.mxu0 %v208
    %260 = vmatprep.subr.mxu0 0.0
    %261 = vmatpush1.msra.mxu0 %v207
    %262 = vmatprep.subr.mxu0 0.0
    %263 = vmatpush2.msra.mxu0 0.0
    %264 = vmatprep.subr.mxu0 0.0
    %265 = vmatpush2.msra.mxu0 0.0
    %266 = vmatprep.subr.mxu0 0.0
    %267 = vmatpush2.msra.mxu0 0.0
    %268 = vmatprep.subr.mxu0 0.0
    %269 = vmatpush2.msra.mxu0 0.0
    %270 = vmatprep.subr.mxu0 0.0
    %271 = vmatpush2.msra.mxu0 0.0
    %272 = vmatprep.subr.mxu0 0.0
    %273 = vmatpush2.msra.mxu0 0.0
    %274 = vmatprep.subr.mxu0 0.0
    %275 = vmatpush2.msra.mxu0 0.0
    %276 = vmatprep.subr.mxu0 0.0
    %277 = vmatpush2.msra.mxu0 0.0
    %278 = vmatprep.subr.mxu0 0.0
    %279 = vmatpush2.msra.mxu0 0.0
    %280 = vmatprep.subr.mxu0 0.0
    %281 = vmatpush2.msra.mxu0 0.0
    %282 = vmatprep.subr.mxu0 0.0
    %283 = vmatpush2.msra.mxu0 0.0
    %284 = vmatprep.subr.mxu0 0.0
    %285 = vmatpush2.msra.mxu0 0.0
    %286 = vmatprep.subr.mxu0 0.0
    %287 = vmatpush2.msra.mxu0 0.0
    %288 = vmatprep.subr.mxu0 0.0
    %289 = vmatpush2.msra.mxu0 0.0
    %290 = vmatprep.subr.mxu0 0.0
    %291 = vmatpush2.msra.mxu0 0.0
    %292 = vmatprep.subr.mxu0 0.0
    %293 = vmatpush2.msra.mxu0 0.0
    %294 = vmatprep.mubr.f32.mxu0 0.0
    %295 = vmatmul.mubr.f32.gmra.mxu0 %v205
    %v296 = vpop.f32.mrf.mxu0
    %v297 = vadd.f32 %v228, %v296
    %v298 = vpop.f32.mrf.mxu0
    %299 = vmatprep.mubr.f32.mxu0 0.0
    %300 = vmatmul.mubr.f32.gmra.mxu0 %v206
    %v301 = vpop.f32.mrf.mxu0
    %v302 = vadd.f32 %v228, %v301
    %v303 = vpop.f32.mrf.mxu0
    %304 = vdwg.mxu0
    %v305 = vmul.f32 %v297, 0.1
    %v306 = vmul.f32 %v302, 0.1
    %v307 = vmax.f32 %v297, %v305
    %v308 = vmax.f32 %v302, %v306
    %v309 = vld [vmem:[#allocation8] sm:$0xff]
    %v310 = vld [vmem:[#allocation8 + $0x8] sm:$0xff]
    %v311 = vld [vmem:[#allocation8 + $0x10] sm:$0xff]
    %v312 = vld [vmem:[#allocation8 + $0x18] sm:$0xff]
    %v313 = vld [vmem:[#allocation8 + $0x20] sm:$0xff]
    %v314 = vld [vmem:[#allocation8 + $0x28] sm:$0xff]
    %v315 = vld [vmem:[#allocation8 + $0x30] sm:$0xff]
    %v316 = vld [vmem:[#allocation8 + $0x38] sm:$0xff]
    %v317 = vld [vmem:[#allocation8 + $0x40] sm:$0xff]
    %v318 = vld [vmem:[#allocation8 + $0x48] sm:$0xff]
    %v319 = vld [vmem:[#allocation8 + $0x50] sm:$0xff]
    %v320 = vld [vmem:[#allocation8 + $0x58] sm:$0xff]
    %v321 = vld [vmem:[#allocation8 + $0x60] sm:$0xff]
    %v322 = vld [vmem:[#allocation8 + $0x68] sm:$0xff]
    %v323 = vld [vmem:[#allocation8 + $0x70] sm:$0xff]
    %v324 = vld [vmem:[#allocation8 + $0x78] sm:$0xff]
    %v325 = vld [vmem:[%s6] sm:$0x1]
    %v327 = vlaneseq
    %v328 = vshrl.u32 %v327, 7
    %v329 = vsub.s32 0, %v328
    %v330 = vrot.slane %v325, %v329
    %332 = vmatprep.subr.mxu0 0.0
    %333 = vmatpush1.msra.mxu0 %v324
    %334 = vmatprep.subr.mxu0 0.0
    %335 = vmatpush1.msra.mxu0 %v323
    %336 = vmatprep.subr.mxu0 0.0
    %337 = vmatpush1.msra.mxu0 %v322
    %338 = vmatprep.subr.mxu0 0.0
    %339 = vmatpush1.msra.mxu0 %v321
    %340 = vmatprep.subr.mxu0 0.0
    %341 = vmatpush1.msra.mxu0 %v320
    %342 = vmatprep.subr.mxu0 0.0
    %343 = vmatpush1.msra.mxu0 %v319
    %344 = vmatprep.subr.mxu0 0.0
    %345 = vmatpush1.msra.mxu0 %v318
    %346 = vmatprep.subr.mxu0 0.0
    %347 = vmatpush1.msra.mxu0 %v317
    %348 = vmatprep.subr.mxu0 0.0
    %349 = vmatpush1.msra.mxu0 %v316
    %350 = vmatprep.subr.mxu0 0.0
    %351 = vmatpush1.msra.mxu0 %v315
    %352 = vmatprep.subr.mxu0 0.0
    %353 = vmatpush1.msra.mxu0 %v314
    %354 = vmatprep.subr.mxu0 0.0
    %355 = vmatpush1.msra.mxu0 %v313
    %356 = vmatprep.subr.mxu0 0.0
    %357 = vmatpush1.msra.mxu0 %v312
    %358 = vmatprep.subr.mxu0 0.0
    %359 = vmatpush1.msra.mxu0 %v311
    %360 = vmatprep.subr.mxu0 0.0
    %361 = vmatpush1.msra.mxu0 %v310
    %362 = vmatprep.subr.mxu0 0.0
    %363 = vmatpush1.msra.mxu0 %v309
    %364 = vmatprep.subr.mxu0 0.0
    %365 = vmatpush2.msra.mxu0 0.0
    %366 = vmatprep.subr.mxu0 0.0
    %367 = vmatpush2.msra.mxu0 0.0
    %368 = vmatprep.subr.mxu0 0.0
    %369 = vmatpush2.msra.mxu0 0.0
    %370 = vmatprep.subr.mxu0 0.0
    %371 = vmatpush2.msra.mxu0 0.0
    %372 = vmatprep.subr.mxu0 0.0
    %373 = vmatpush2.msra.mxu0 0.0
    %374 = vmatprep.subr.mxu0 0.0
    %375 = vmatpush2.msra.mxu0 0.0
    %376 = vmatprep.subr.mxu0 0.0
    %377 = vmatpush2.msra.mxu0 0.0
    %378 = vmatprep.subr.mxu0 0.0
    %379 = vmatpush2.msra.mxu0 0.0
    %380 = vmatprep.subr.mxu0 0.0
    %381 = vmatpush2.msra.mxu0 0.0
    %382 = vmatprep.subr.mxu0 0.0
    %383 = vmatpush2.msra.mxu0 0.0
    %384 = vmatprep.subr.mxu0 0.0
    %385 = vmatpush2.msra.mxu0 0.0
    %386 = vmatprep.subr.mxu0 0.0
    %387 = vmatpush2.msra.mxu0 0.0
    %388 = vmatprep.subr.mxu0 0.0
    %389 = vmatpush2.msra.mxu0 0.0
    %390 = vmatprep.subr.mxu0 0.0
    %391 = vmatpush2.msra.mxu0 0.0
    %392 = vmatprep.subr.mxu0 0.0
    %393 = vmatpush2.msra.mxu0 0.0
    %394 = vmatprep.subr.mxu0 0.0
    %395 = vmatpush2.msra.mxu0 0.0
    %396 = vmatprep.mubr.f32.mxu0 0.0
    %397 = vmatmul.mubr.f32.gmra.mxu0 %v307
    %v398 = vpop.f32.mrf.mxu0
    %v399 = vadd.f32 %v330, %v398
    %v400 = vpop.f32.mrf.mxu0
    %401 = vmatprep.mubr.f32.mxu0 0.0
    %402 = vmatmul.mubr.f32.gmra.mxu0 %v308
    %v403 = vpop.f32.mrf.mxu0
    %v404 = vadd.f32 %v330, %v403
    %v405 = vpop.f32.mrf.mxu0
    %406 = vdwg.mxu0
    %407 = vmax.xlane.f32.xlu0 %v399
    %v408 = vpop.xlane.xlu0 %407
    %409 = vmax.xlane.f32.xlu0 %v404
    %v410 = vpop.xlane.xlu0 %409
    %v411 = vsub.f32 %v399, %v408
    %v412 = vsub.f32 %v404, %v410
    %v413 = vmul.f32 %v411, 1.442695
    %v414 = vpow.pop %v413
    %v415 = vmul.f32 %v412, 1.442695
    %v416 = vpow.pop %v415
    %417 = vadd.xlane.f32.xlu0 %v414
    %v418 = vpop.xlane.xlu0 %417
    %419 = vadd.xlane.f32.xlu0 %v416
    %v420 = vpop.xlane.xlu0 %419
    %v421 = vrcp.pop %v418
    %v422 = vmul.f32 %v414, %v421
    %v423 = vrcp.pop %v420
    %v424 = vmul.f32 %v416, %v423
    %v425 = vpack.c.bf16 %v424, %v422
    %v427 = vunpack.c.l.b16 %v425
    %v428 = vunpack.c.h.b16 %v425
    %v429 = vpack.c.b16 %v427, %v427
    %v430 = vpack.c.b16 %v428, %v428
    %433 = vst [vmem:[#allocation10] sm:$0xf] %v429
    %434 = vst [vmem:[#allocation10 + $0x4] sm:$0xf] %v430
    // Predicated region
    $region46: #{tpu_custom_call.1} parent=1 // pred_check
      _
    $region47: #{tpu_custom_call.1} parent=1 // pred_check_branch
      %436 = sbr.rel (0) target = $region49
    $region48: #{tpu_custom_call.1} parent=1 // pred_region
      %s438 = ssub.s32 128, 128
      %439 = vsyncadd [#allocation4], %s438
      %s440 = sshll.u32 [#allocation10], 4
      %s441 = int_to_ptr.vmem [resolvable:$true] %s440
      %446 = dma.vmem_to_hbm [thread:$0]  %s441, 128, %s7, [#allocation4], 64, 64, 4
    $region49: #{tpu_custom_call.1} parent=1 // pred_fallthru
      _
    // Predicated region
    $region50: #{tpu_custom_call.1} parent=1 // pred_check
      _
    $region51: #{tpu_custom_call.1} parent=1 // pred_check_branch
      %448 = sbr.rel (0) target = $region53
    $region52: #{tpu_custom_call.1} parent=1 // pred_region
      %449 = dma.done [#allocation4], 128
    $region53: #{tpu_custom_call.1} parent=1 // pred_fallthru
      _
    %450 = vsyncpa [#allocation3], 1
    %451 = vsyncpa [#allocation6], 1
    %452 = vsyncpa [#allocation9], 1
    %453 = vsyncpa [#allocation4], 1

</llo_original>
